<compile_context>
chip_gen: v5e
topology: v5e:2x2
jax: 0.10.0
libtpu: 0.0.40
codegen_flags: <defaults>
</compile_context>

<pallas_src>
import functools

import jax
import jax.numpy as jnp
from jax.experimental import pallas as pl
from jax.experimental.pallas import tpu as pltpu

HIDDEN = 256
MAX_TM = 2048  # v5e-safe cap: f32 intermediates at tm=2048 fit default scoped VMEM.


def _round_up(n, m):
    return (n + m - 1) // m * m


def _device_kind():
    try:
        return jax.devices()[0].device_kind.lower()
    except Exception:
        return ""


def _default_interm_dtype():
    # v5e has no bf16 VPU/EUP -> keep the fc1/fc2 elementwise epilogue in f32 there.
    return jnp.float32 if "v5" in _device_kind() else jnp.bfloat16


def _num_parallel_cores():
    # v7x has 2 TensorCores per chip, sharded via the "parallel" grid axis.
    kind = _device_kind()
    return 2 if ("7x" in kind or "v7" in kind) else 1


def actor_kernel(x_ref, w1_ref, b1_ref, w2_ref, b2_ref, wmu_ref, bmu_ref,
                 scale_ref, bias_ref, o_ref, *, interm_dtype):
    # fc1 + relu: bf16 MXU inputs, f32 accumulation, epilogue in interm_dtype.
    x = x_ref[...].astype(jnp.bfloat16)
    h1 = jnp.dot(x, w1_ref[...], preferred_element_type=jnp.float32)
    h1 = jnp.maximum(h1.astype(interm_dtype) + b1_ref[...].astype(interm_dtype), 0.0)
    # fc2 + relu
    h2 = jnp.dot(h1.astype(jnp.bfloat16), w2_ref[...],
                 preferred_element_type=jnp.float32)
    h2 = jnp.maximum(h2.astype(interm_dtype) + b2_ref[...].astype(interm_dtype), 0.0)
    # fc_mu + tanh + action scale/bias: f32 epilogue, compact (unpadded) store.
    mu = jnp.dot(h2.astype(jnp.bfloat16), wmu_ref[...],
                 preferred_element_type=jnp.float32)
    mu = jnp.tanh(mu + bmu_ref[...])
    o_ref[...] = mu * scale_ref[...] + bias_ref[...]


def prepare_params(params):
    """Cast weights to bf16 for the MXU; keep bias/scale vectors in f32."""
    (w1, b1, w2, b2, wmu, bmu, scale, bias) = params
    return (w1.astype(jnp.bfloat16), b1.astype(jnp.float32),
            w2.astype(jnp.bfloat16), b2.astype(jnp.float32),
            wmu.astype(jnp.bfloat16), bmu.astype(jnp.float32),
            scale.astype(jnp.float32), bias.astype(jnp.float32))


def _choose_tile(batch, tm, cores):
    tm = max(8, min(tm, MAX_TM))
    n_tiles = pl.cdiv(batch, tm)
    # On v7x make sure the "parallel" axis has >=1 tile per TensorCore
    # (skip for tiny batches where the extra ~0.35us grid step isn't worth it).
    if n_tiles < cores and batch >= 8 * cores:
        n_tiles = cores
    # Spread rows evenly so the ragged last tile isn't mostly padding.
    return _round_up(pl.cdiv(batch, n_tiles), 8)


def actor_forward(x, prepared, *, tm=1024, interm_dtype=None):
    (w1, b1, w2, b2, wmu, bmu, scale, bias) = prepared
    batch, obs_dim = x.shape
    hidden = w1.shape[1]
    act_dim = wmu.shape[1]
    if interm_dtype is None:
        interm_dtype = _default_interm_dtype()

    tm_eff = _choose_tile(batch, tm, _num_parallel_cores())
    grid_steps = pl.cdiv(batch, tm_eff)

    rows = grid_steps * tm_eff  # rows actually pushed through the MXU
    flops = 2 * rows * (obs_dim * hidden + hidden * hidden + hidden * act_dim)
    bytes_accessed = (batch * obs_dim * 4                    # x (f32)
                      + (w1.size + w2.size + wmu.size) * 2   # bf16 weights
                      + (b1.size + b2.size + bmu.size
                         + scale.size + bias.size) * 4       # f32 vectors
                      + batch * act_dim * 4)                 # compact output
    cost = pl.CostEstimate(flops=flops, transcendentals=rows * act_dim,
                           bytes_accessed=bytes_accessed)

    kernel = functools.partial(actor_kernel, interm_dtype=interm_dtype)
    const2 = lambda i: (0, 0)

    def run(single_buffer_consts):
        const_kwargs = ({"pipeline_mode": pl.Buffered(1)}
                        if single_buffer_consts else {})

        def const_spec(shape):
            return pl.BlockSpec(shape, const2, **const_kwargs)

        return pl.pallas_call(
            kernel,
            out_shape=jax.ShapeDtypeStruct((batch, act_dim), jnp.float32),
            grid=(grid_steps,),
            in_specs=[
                pl.BlockSpec((tm_eff, obs_dim), lambda i: (i, 0)),  # x (pipelined)
                const_spec((obs_dim, hidden)),                      # w1 (resident)
                const_spec((1, hidden)),                            # b1
                const_spec((hidden, hidden)),                       # w2 (resident)
                const_spec((1, hidden)),                            # b2
                const_spec((hidden, act_dim)),                      # w_mu (resident)
                const_spec((1, act_dim)),                           # b_mu
                const_spec((1, act_dim)),                           # action_scale
                const_spec((1, act_dim)),                           # action_bias
            ],
            out_specs=pl.BlockSpec((tm_eff, act_dim), lambda i: (i, 0)),
            compiler_params=pltpu.CompilerParams(
                dimension_semantics=("parallel",)),                 # megacore on v7x
            cost_estimate=cost,
        )(x, w1, b1, w2, b2, wmu, bmu, scale, bias)

    try:
        return run(single_buffer_consts=True)
    except Exception:
        # pl.Buffered(1) unsupported on this jax version: fall back to defaults.
        return run(single_buffer_consts=False)


def make_params(key, obs_dim, act_dim, hidden=HIDDEN):
    ks = jax.random.split(key, 6)

    # Deterministic synthetic init (uniform, roughly PyTorch-Linear scale).
    def unif(k, shape, fan_in):
        bound = 1.0 / jnp.sqrt(jnp.float32(fan_in))
        return jax.random.uniform(k, shape, jnp.float32, -bound, bound)

    w1 = unif(ks[0], (obs_dim, hidden), obs_dim)
    b1 = unif(ks[1], (1, hidden), obs_dim)
    w2 = unif(ks[2], (hidden, hidden), hidden)
    b2 = unif(ks[3], (1, hidden), hidden)
    wmu = unif(ks[4], (hidden, act_dim), hidden)
    bmu = unif(ks[5], (1, act_dim), hidden)
    # action space: high = +2, low = -2  -> scale = 2, bias = 0
    action_scale = jnp.full((1, act_dim), 2.0, jnp.float32)
    action_bias = jnp.zeros((1, act_dim), jnp.float32)
    return (w1, b1, w2, b2, wmu, bmu, action_scale, action_bias)


def actor_ref(x, params, interm_dtype):
    """Pure-JAX reference with precision matched to the kernel."""
    (w1, b1, w2, b2, wmu, bmu, scale, bias) = params
    bf = jnp.bfloat16
    h1 = jnp.dot(x.astype(bf), w1.astype(bf), preferred_element_type=jnp.float32)
    h1 = jnp.maximum(h1.astype(interm_dtype) + b1.astype(interm_dtype), 0.0)
    h2 = jnp.dot(h1.astype(bf), w2.astype(bf), preferred_element_type=jnp.float32)
    h2 = jnp.maximum(h2.astype(interm_dtype) + b2.astype(interm_dtype), 0.0)
    mu = jnp.tanh(jnp.dot(h2.astype(bf), wmu.astype(bf),
                          preferred_element_type=jnp.float32) + bmu)
    return mu * scale + bias


def actor_ref_f32(x, params):
    """Full-f32 reference (matches the PyTorch module's math exactly)."""
    (w1, b1, w2, b2, wmu, bmu, scale, bias) = params
    h1 = jnp.maximum(x @ w1 + b1, 0.0)
    h2 = jnp.maximum(h1 @ w2 + b2, 0.0)
    mu = jnp.tanh(h2 @ wmu + bmu)
    return mu * scale + bias


if __name__ == "__main__":
    batch, obs_dim, act_dim = 8, 16, 4
    key = jax.random.PRNGKey(0)
    kx, kp, kx2 = jax.random.split(key, 3)

    params = make_params(kp, obs_dim, act_dim)
    prepared = prepare_params(params)
    interm_dtype = _default_interm_dtype()

    # Small batch: single grid step, compact (unpadded) output.
    x = jax.random.normal(kx, (batch, obs_dim), jnp.float32)
    out = jax.block_until_ready(actor_forward(x, prepared))
    ref = actor_ref(x, params, interm_dtype)
    assert out.shape == (batch, act_dim)
    assert jnp.allclose(out, ref, atol=2e-3, rtol=2e-3), \
        float(jnp.max(jnp.abs(out - ref)))
    # Loose sanity check against the exact-f32 (PyTorch-equivalent) math.
    # TODO(synk): for exact f32 checkpoint parity, keep all layers f32 on the MXU.
    ref32 = actor_ref_f32(x, params)
    assert jnp.allclose(out, ref32, atol=1e-1), \
        float(jnp.max(jnp.abs(out - ref32)))

    # Larger batch: multi-step grid + ragged last block (no wrapper pad/slice).
    batch2 = 272
    x2 = jax.random.normal(kx2, (batch2, obs_dim), jnp.float32)
    out2 = jax.block_until_ready(actor_forward(x2, prepared, tm=128))
    ref2 = actor_ref(x2, params, interm_dtype)
    assert out2.shape == (batch2, act_dim)
    assert jnp.allclose(out2, ref2, atol=2e-3, rtol=2e-3), \
        float(jnp.max(jnp.abs(out2 - ref2)))

    print("KERNEL_OK")
</pallas_src>

<mosaic_0001>
module attributes {stable_mosaic.version = 11 : i64} {
  func.func @actor_kernel(%arg0: i32, %arg1: memref<8x16xf32, #tpu.memory_space<vmem>>, %arg2: memref<16x256xbf16, #tpu.memory_space<vmem>>, %arg3: memref<1x256xf32, #tpu.memory_space<vmem>>, %arg4: memref<256x256xbf16, #tpu.memory_space<vmem>>, %arg5: memref<1x256xf32, #tpu.memory_space<vmem>>, %arg6: memref<256x4xbf16, #tpu.memory_space<vmem>>, %arg7: memref<1x4xf32, #tpu.memory_space<vmem>>, %arg8: memref<1x4xf32, #tpu.memory_space<vmem>>, %arg9: memref<1x4xf32, #tpu.memory_space<vmem>>, %arg10: memref<8x4xf32, #tpu.memory_space<vmem>>) attributes {dimension_semantics = [#tpu.dimension_semantics<parallel>], iteration_bounds = array<i64: 1>, scalar_prefetch = 0 : i64, scratch_operands = 0 : i64, tpu.core_type = #tpu.core_type<tc>, window_params = [{transform_indices = @transform_0, window_bounds = array<i64: 8, 16>}, {pipeline_mode = #tpu.pipeline_mode<synchronous>, transform_indices = @transform_1, window_bounds = array<i64: 16, 256>}, {pipeline_mode = #tpu.pipeline_mode<synchronous>, transform_indices = @transform_2, window_bounds = array<i64: 1, 256>}, {pipeline_mode = #tpu.pipeline_mode<synchronous>, transform_indices = @transform_3, window_bounds = array<i64: 256, 256>}, {pipeline_mode = #tpu.pipeline_mode<synchronous>, transform_indices = @transform_4, window_bounds = array<i64: 1, 256>}, {pipeline_mode = #tpu.pipeline_mode<synchronous>, transform_indices = @transform_5, window_bounds = array<i64: 256, 4>}, {pipeline_mode = #tpu.pipeline_mode<synchronous>, transform_indices = @transform_6, window_bounds = array<i64: 1, 4>}, {pipeline_mode = #tpu.pipeline_mode<synchronous>, transform_indices = @transform_7, window_bounds = array<i64: 1, 4>}, {pipeline_mode = #tpu.pipeline_mode<synchronous>, transform_indices = @transform_8, window_bounds = array<i64: 1, 4>}, {transform_indices = @transform_9, window_bounds = array<i64: 8, 4>}]} {
    %c0 = arith.constant 0 : index
    %c0_0 = arith.constant 0 : index
    %0 = vector.load %arg1[%c0, %c0_0] : memref<8x16xf32, #tpu.memory_space<vmem>>, vector<8x16xf32>
    %1 = arith.truncf %0 : vector<8x16xf32> to vector<8x16xbf16>
    %c0_1 = arith.constant 0 : index
    %c0_2 = arith.constant 0 : index
    %2 = vector.load %arg2[%c0_1, %c0_2] : memref<16x256xbf16, #tpu.memory_space<vmem>>, vector<16x256xbf16>
    %cst = arith.constant dense<0.000000e+00> : vector<8x256xf32>
    %3 = tpu.matmul %1, %2, %cst {dimension_numbers = #tpu.dot_dimension_numbers<[1], [0], [0], [1], [0, 0, 1, 1], [], []>} : vector<8x16xbf16>, vector<16x256xbf16>, vector<8x256xf32> -> vector<8x256xf32>
    %4 = arith.truncf %3 : vector<8x256xf32> to vector<8x256xbf16>
    %c0_3 = arith.constant 0 : index
    %c0_4 = arith.constant 0 : index
    %5 = vector.load %arg3[%c0_3, %c0_4] : memref<1x256xf32, #tpu.memory_space<vmem>>, vector<1x256xf32>
    %6 = arith.truncf %5 : vector<1x256xf32> to vector<1x256xbf16>
    %7 = vector.broadcast %6 : vector<1x256xbf16> to vector<8x256xbf16>
    %8 = arith.addf %4, %7 : vector<8x256xbf16>
    %cst_5 = arith.constant 0.000000e+00 : bf16
    %9 = vector.broadcast %cst_5 : bf16 to vector<8x256xbf16>
    %10 = arith.maximumf %8, %9 : vector<8x256xbf16>
    %c0_6 = arith.constant 0 : index
    %c0_7 = arith.constant 0 : index
    %11 = vector.load %arg4[%c0_6, %c0_7] : memref<256x256xbf16, #tpu.memory_space<vmem>>, vector<256x256xbf16>
    %cst_8 = arith.constant dense<0.000000e+00> : vector<8x256xf32>
    %12 = tpu.matmul %10, %11, %cst_8 {dimension_numbers = #tpu.dot_dimension_numbers<[1], [0], [0], [1], [0, 0, 1, 1], [], []>} : vector<8x256xbf16>, vector<256x256xbf16>, vector<8x256xf32> -> vector<8x256xf32>
    %13 = arith.truncf %12 : vector<8x256xf32> to vector<8x256xbf16>
    %c0_9 = arith.constant 0 : index
    %c0_10 = arith.constant 0 : index
    %14 = vector.load %arg5[%c0_9, %c0_10] : memref<1x256xf32, #tpu.memory_space<vmem>>, vector<1x256xf32>
    %15 = arith.truncf %14 : vector<1x256xf32> to vector<1x256xbf16>
    %16 = vector.broadcast %15 : vector<1x256xbf16> to vector<8x256xbf16>
    %17 = arith.addf %13, %16 : vector<8x256xbf16>
    %cst_11 = arith.constant 0.000000e+00 : bf16
    %18 = vector.broadcast %cst_11 : bf16 to vector<8x256xbf16>
    %19 = arith.maximumf %17, %18 : vector<8x256xbf16>
    %c0_12 = arith.constant 0 : index
    %c0_13 = arith.constant 0 : index
    %20 = vector.load %arg6[%c0_12, %c0_13] : memref<256x4xbf16, #tpu.memory_space<vmem>>, vector<256x4xbf16>
    %cst_14 = arith.constant dense<0.000000e+00> : vector<8x4xf32>
    %21 = tpu.matmul %19, %20, %cst_14 {dimension_numbers = #tpu.dot_dimension_numbers<[1], [0], [0], [1], [0, 0, 1, 1], [], []>} : vector<8x256xbf16>, vector<256x4xbf16>, vector<8x4xf32> -> vector<8x4xf32>
    %c0_15 = arith.constant 0 : index
    %c0_16 = arith.constant 0 : index
    %22 = vector.load %arg7[%c0_15, %c0_16] : memref<1x4xf32, #tpu.memory_space<vmem>>, vector<1x4xf32>
    %23 = vector.broadcast %22 : vector<1x4xf32> to vector<8x4xf32>
    %24 = arith.addf %21, %23 : vector<8x4xf32>
    %25 = math.tanh %24 : vector<8x4xf32>
    %c0_17 = arith.constant 0 : index
    %c0_18 = arith.constant 0 : index
    %26 = vector.load %arg8[%c0_17, %c0_18] : memref<1x4xf32, #tpu.memory_space<vmem>>, vector<1x4xf32>
    %27 = vector.broadcast %26 : vector<1x4xf32> to vector<8x4xf32>
    %28 = arith.mulf %25, %27 : vector<8x4xf32>
    %c0_19 = arith.constant 0 : index
    %c0_20 = arith.constant 0 : index
    %29 = vector.load %arg9[%c0_19, %c0_20] : memref<1x4xf32, #tpu.memory_space<vmem>>, vector<1x4xf32>
    %30 = vector.broadcast %29 : vector<1x4xf32> to vector<8x4xf32>
    %31 = arith.addf %28, %30 : vector<8x4xf32>
    %c0_21 = arith.constant 0 : index
    %c0_22 = arith.constant 0 : index
    %32 = vector.load %arg10[%c0_21, %c0_22] : memref<8x4xf32, #tpu.memory_space<vmem>>, vector<8x4xf32>
    tpu.vector_store %arg10[%c0_21, %c0_22], %31 {strides = array<i32>} : memref<8x4xf32, #tpu.memory_space<vmem>>, vector<8x4xf32>,
    return
  }
  func.func @transform_0(%arg0: i32) -> (i32, i32) {
    %c0_i32 = arith.constant 0 : i32
    %c0_i32_0 = arith.constant 0 : i32
    return %arg0, %c0_i32 : i32, i32
  }
  func.func @transform_1(%arg0: i32) -> (i32, i32) {
    %c0_i32 = arith.constant 0 : i32
    %c0_i32_0 = arith.constant 0 : i32
    %c0_i32_1 = arith.constant 0 : i32
    return %c0_i32, %c0_i32_0 : i32, i32
  }
  func.func @transform_2(%arg0: i32) -> (i32, i32) {
    %c0_i32 = arith.constant 0 : i32
    %c0_i32_0 = arith.constant 0 : i32
    %c0_i32_1 = arith.constant 0 : i32
    return %c0_i32, %c0_i32_0 : i32, i32
  }
  func.func @transform_3(%arg0: i32) -> (i32, i32) {
    %c0_i32 = arith.constant 0 : i32
    %c0_i32_0 = arith.constant 0 : i32
    %c0_i32_1 = arith.constant 0 : i32
    return %c0_i32, %c0_i32_0 : i32, i32
  }
  func.func @transform_4(%arg0: i32) -> (i32, i32) {
    %c0_i32 = arith.constant 0 : i32
    %c0_i32_0 = arith.constant 0 : i32
    %c0_i32_1 = arith.constant 0 : i32
    return %c0_i32, %c0_i32_0 : i32, i32
  }
  func.func @transform_5(%arg0: i32) -> (i32, i32) {
    %c0_i32 = arith.constant 0 : i32
    %c0_i32_0 = arith.constant 0 : i32
    %c0_i32_1 = arith.constant 0 : i32
    return %c0_i32, %c0_i32_0 : i32, i32
  }
  func.func @transform_6(%arg0: i32) -> (i32, i32) {
    %c0_i32 = arith.constant 0 : i32
    %c0_i32_0 = arith.constant 0 : i32
    %c0_i32_1 = arith.constant 0 : i32
    return %c0_i32, %c0_i32_0 : i32, i32
  }
  func.func @transform_7(%arg0: i32) -> (i32, i32) {
    %c0_i32 = arith.constant 0 : i32
    %c0_i32_0 = arith.constant 0 : i32
    %c0_i32_1 = arith.constant 0 : i32
    return %c0_i32, %c0_i32_0 : i32, i32
  }
  func.func @transform_8(%arg0: i32) -> (i32, i32) {
    %c0_i32 = arith.constant 0 : i32
    %c0_i32_0 = arith.constant 0 : i32
    %c0_i32_1 = arith.constant 0 : i32
    return %c0_i32, %c0_i32_0 : i32, i32
  }
  func.func @transform_9(%arg0: i32) -> (i32, i32) {
    %c0_i32 = arith.constant 0 : i32
    %c0_i32_0 = arith.constant 0 : i32
    return %arg0, %c0_i32 : i32, i32
  }
}

module attributes {stable_mosaic.version = 11 : i64} {
  func.func @actor_kernel(%arg0: i32, %arg1: memref<8x16xf32, #tpu.memory_space<vmem>>, %arg2: memref<16x256xbf16, #tpu.memory_space<vmem>>, %arg3: memref<1x256xf32, #tpu.memory_space<vmem>>, %arg4: memref<256x256xbf16, #tpu.memory_space<vmem>>, %arg5: memref<1x256xf32, #tpu.memory_space<vmem>>, %arg6: memref<256x4xbf16, #tpu.memory_space<vmem>>, %arg7: memref<1x4xf32, #tpu.memory_space<vmem>>, %arg8: memref<1x4xf32, #tpu.memory_space<vmem>>, %arg9: memref<1x4xf32, #tpu.memory_space<vmem>>, %arg10: memref<8x4xf32, #tpu.memory_space<vmem>>) attributes {dimension_semantics = [#tpu.dimension_semantics<parallel>], iteration_bounds = array<i64: 1>, scalar_prefetch = 0 : i64, scratch_operands = 0 : i64, tpu.core_type = #tpu.core_type<tc>, window_params = [{transform_indices = @transform_0, window_bounds = array<i64: 8, 16>}, {pipeline_mode = #tpu.pipeline_mode<synchronous>, transform_indices = @transform_1, window_bounds = array<i64: 16, 256>}, {pipeline_mode = #tpu.pipeline_mode<synchronous>, transform_indices = @transform_2, window_bounds = array<i64: 1, 256>}, {pipeline_mode = #tpu.pipeline_mode<synchronous>, transform_indices = @transform_3, window_bounds = array<i64: 256, 256>}, {pipeline_mode = #tpu.pipeline_mode<synchronous>, transform_indices = @transform_4, window_bounds = array<i64: 1, 256>}, {pipeline_mode = #tpu.pipeline_mode<synchronous>, transform_indices = @transform_5, window_bounds = array<i64: 256, 4>}, {pipeline_mode = #tpu.pipeline_mode<synchronous>, transform_indices = @transform_6, window_bounds = array<i64: 1, 4>}, {pipeline_mode = #tpu.pipeline_mode<synchronous>, transform_indices = @transform_7, window_bounds = array<i64: 1, 4>}, {pipeline_mode = #tpu.pipeline_mode<synchronous>, transform_indices = @transform_8, window_bounds = array<i64: 1, 4>}, {transform_indices = @transform_9, window_bounds = array<i64: 8, 4>}]} {
    %c0 = arith.constant 0 : index
    %c0_0 = arith.constant 0 : index
    %0 = vector.load %arg1[%c0, %c0_0] : memref<8x16xf32, #tpu.memory_space<vmem>>, vector<8x16xf32>
    %1 = arith.truncf %0 : vector<8x16xf32> to vector<8x16xbf16>
    %c0_1 = arith.constant 0 : index
    %c0_2 = arith.constant 0 : index
    %2 = vector.load %arg2[%c0_1, %c0_2] : memref<16x256xbf16, #tpu.memory_space<vmem>>, vector<16x256xbf16>
    %cst = arith.constant dense<0.000000e+00> : vector<8x256xf32>
    %3 = tpu.matmul %1, %2, %cst {dimension_numbers = #tpu.dot_dimension_numbers<[1], [0], [0], [1], [0, 0, 1, 1], [], []>} : vector<8x16xbf16>, vector<16x256xbf16>, vector<8x256xf32> -> vector<8x256xf32>
    %4 = arith.truncf %3 : vector<8x256xf32> to vector<8x256xbf16>
    %c0_3 = arith.constant 0 : index
    %c0_4 = arith.constant 0 : index
    %5 = vector.load %arg3[%c0_3, %c0_4] : memref<1x256xf32, #tpu.memory_space<vmem>>, vector<1x256xf32>
    %6 = arith.truncf %5 : vector<1x256xf32> to vector<1x256xbf16>
    %7 = vector.broadcast %6 : vector<1x256xbf16> to vector<8x256xbf16>
    %8 = arith.addf %4, %7 : vector<8x256xbf16>
    %cst_5 = arith.constant 0.000000e+00 : bf16
    %9 = vector.broadcast %cst_5 : bf16 to vector<8x256xbf16>
    %10 = arith.maximumf %8, %9 : vector<8x256xbf16>
    %c0_6 = arith.constant 0 : index
    %c0_7 = arith.constant 0 : index
    %11 = vector.load %arg4[%c0_6, %c0_7] : memref<256x256xbf16, #tpu.memory_space<vmem>>, vector<256x256xbf16>
    %cst_8 = arith.constant dense<0.000000e+00> : vector<8x256xf32>
    %12 = tpu.matmul %10, %11, %cst_8 {dimension_numbers = #tpu.dot_dimension_numbers<[1], [0], [0], [1], [0, 0, 1, 1], [], []>} : vector<8x256xbf16>, vector<256x256xbf16>, vector<8x256xf32> -> vector<8x256xf32>
    %13 = arith.truncf %12 : vector<8x256xf32> to vector<8x256xbf16>
    %c0_9 = arith.constant 0 : index
    %c0_10 = arith.constant 0 : index
    %14 = vector.load %arg5[%c0_9, %c0_10] : memref<1x256xf32, #tpu.memory_space<vmem>>, vector<1x256xf32>
    %15 = arith.truncf %14 : vector<1x256xf32> to vector<1x256xbf16>
    %16 = vector.broadcast %15 : vector<1x256xbf16> to vector<8x256xbf16>
    %17 = arith.addf %13, %16 : vector<8x256xbf16>
    %cst_11 = arith.constant 0.000000e+00 : bf16
    %18 = vector.broadcast %cst_11 : bf16 to vector<8x256xbf16>
    %19 = arith.maximumf %17, %18 : vector<8x256xbf16>
    %c0_12 = arith.constant 0 : index
    %c0_13 = arith.constant 0 : index
    %20 = vector.load %arg6[%c0_12, %c0_13] : memref<256x4xbf16, #tpu.memory_space<vmem>>, vector<256x4xbf16>
    %cst_14 = arith.constant dense<0.000000e+00> : vector<8x4xf32>
    %21 = tpu.matmul %19, %20, %cst_14 {dimension_numbers = #tpu.dot_dimension_numbers<[1], [0], [0], [1], [0, 0, 1, 1], [], []>} : vector<8x256xbf16>, vector<256x4xbf16>, vector<8x4xf32> -> vector<8x4xf32>
    %c0_15 = arith.constant 0 : index
    %c0_16 = arith.constant 0 : index
    %22 = vector.load %arg7[%c0_15, %c0_16] : memref<1x4xf32, #tpu.memory_space<vmem>>, vector<1x4xf32>
    %23 = vector.broadcast %22 : vector<1x4xf32> to vector<8x4xf32>
    %24 = arith.addf %21, %23 : vector<8x4xf32>
    %25 = math.tanh %24 : vector<8x4xf32>
    %c0_17 = arith.constant 0 : index
    %c0_18 = arith.constant 0 : index
    %26 = vector.load %arg8[%c0_17, %c0_18] : memref<1x4xf32, #tpu.memory_space<vmem>>, vector<1x4xf32>
    %27 = vector.broadcast %26 : vector<1x4xf32> to vector<8x4xf32>
    %28 = arith.mulf %25, %27 : vector<8x4xf32>
    %c0_19 = arith.constant 0 : index
    %c0_20 = arith.constant 0 : index
    %29 = vector.load %arg9[%c0_19, %c0_20] : memref<1x4xf32, #tpu.memory_space<vmem>>, vector<1x4xf32>
    %30 = vector.broadcast %29 : vector<1x4xf32> to vector<8x4xf32>
    %31 = arith.addf %28, %30 : vector<8x4xf32>
    %c0_21 = arith.constant 0 : index
    %c0_22 = arith.constant 0 : index
    %32 = vector.load %arg10[%c0_21, %c0_22] : memref<8x4xf32, #tpu.memory_space<vmem>>, vector<8x4xf32>
    tpu.vector_store %arg10[%c0_21, %c0_22], %31 {strides = array<i32>} : memref<8x4xf32, #tpu.memory_space<vmem>>, vector<8x4xf32>,
    return
  }
  func.func @transform_0(%arg0: i32) -> (i32, i32) {
    %c0_i32 = arith.constant 0 : i32
    %c0_i32_0 = arith.constant 0 : i32
    return %arg0, %c0_i32 : i32, i32
  }
  func.func @transform_1(%arg0: i32) -> (i32, i32) {
    %c0_i32 = arith.constant 0 : i32
    %c0_i32_0 = arith.constant 0 : i32
    %c0_i32_1 = arith.constant 0 : i32
    return %c0_i32, %c0_i32_0 : i32, i32
  }
  func.func @transform_2(%arg0: i32) -> (i32, i32) {
    %c0_i32 = arith.constant 0 : i32
    %c0_i32_0 = arith.constant 0 : i32
    %c0_i32_1 = arith.constant 0 : i32
    return %c0_i32, %c0_i32_0 : i32, i32
  }
  func.func @transform_3(%arg0: i32) -> (i32, i32) {
    %c0_i32 = arith.constant 0 : i32
    %c0_i32_0 = arith.constant 0 : i32
    %c0_i32_1 = arith.constant 0 : i32
    return %c0_i32, %c0_i32_0 : i32, i32
  }
  func.func @transform_4(%arg0: i32) -> (i32, i32) {
    %c0_i32 = arith.constant 0 : i32
    %c0_i32_0 = arith.constant 0 : i32
    %c0_i32_1 = arith.constant 0 : i32
    return %c0_i32, %c0_i32_0 : i32, i32
  }
  func.func @transform_5(%arg0: i32) -> (i32, i32) {
    %c0_i32 = arith.constant 0 : i32
    %c0_i32_0 = arith.constant 0 : i32
    %c0_i32_1 = arith.constant 0 : i32
    return %c0_i32, %c0_i32_0 : i32, i32
  }
  func.func @transform_6(%arg0: i32) -> (i32, i32) {
    %c0_i32 = arith.constant 0 : i32
    %c0_i32_0 = arith.constant 0 : i32
    %c0_i32_1 = arith.constant 0 : i32
    return %c0_i32, %c0_i32_0 : i32, i32
  }
  func.func @transform_7(%arg0: i32) -> (i32, i32) {
    %c0_i32 = arith.constant 0 : i32
    %c0_i32_0 = arith.constant 0 : i32
    %c0_i32_1 = arith.constant 0 : i32
    return %c0_i32, %c0_i32_0 : i32, i32
  }
  func.func @transform_8(%arg0: i32) -> (i32, i32) {
    %c0_i32 = arith.constant 0 : i32
    %c0_i32_0 = arith.constant 0 : i32
    %c0_i32_1 = arith.constant 0 : i32
    return %c0_i32, %c0_i32_0 : i32, i32
  }
  func.func @transform_9(%arg0: i32) -> (i32, i32) {
    %c0_i32 = arith.constant 0 : i32
    %c0_i32_0 = arith.constant 0 : i32
    return %arg0, %c0_i32 : i32, i32
  }
}

</mosaic_0001>

<llo_original>
// kernel: tpu_custom_call.1
$region0: #{tpu_custom_call.1}
  #allocation0 [shape = 'u32[]', space=smem, size = 0x4, offset = 0x4, fixed_abs, tag = 'smem constant byte address 0x4 - core index']
  #allocation1 [shape = 'u32[72,128]{1,0:T(1,128)}', space=vmem, size = 0x9000, scoped, tag = 'internal scratch']
  %s0 = inlined_call_operand.vmem [shape: f32[8,16], index: 0, kind: input, shape index: {}]
  %s1 = inlined_call_operand.vmem [shape: bf16[16,256], index: 1, kind: input, shape index: {}]
  %s2 = inlined_call_operand.vmem [shape: f32[1,256], index: 2, kind: input, shape index: {}]
  %s3 = inlined_call_operand.hbm [shape: bf16[256,256], index: 3, kind: input, shape index: {}]
  %s4 = inlined_call_operand.vmem [shape: f32[1,256], index: 4, kind: input, shape index: {}]
  %s5 = inlined_call_operand.vmem [shape: bf16[256,4], index: 5, kind: input, shape index: {}]
  %s6 = inlined_call_operand.vmem [shape: f32[1,4], index: 6, kind: input, shape index: {}]
  %s7 = inlined_call_operand.vmem [shape: f32[1,4], index: 7, kind: input, shape index: {}]
  %s8 = inlined_call_operand.vmem [shape: f32[1,4], index: 8, kind: input, shape index: {}]
  %s9 = inlined_call_operand.vmem [shape: f32[8,4], index: 9, kind: output, shape index: {}]
  %s10 = sld [smem:[#allocation0]]
  $region50: #{tpu_custom_call.1} parent=0
    _
  %s12 = ssub.s32 1, %s10
  %s13 = scalar_select 0, %s12, %s10
  $region1: #{tpu_custom_call.1} parent=0
    #allocation2 [shape = 'u8[131072]{0}', space=vmem, size = 0x20000, scoped, tag = 'input window, operand 3, single buffered']
    #allocation3 [shape = 's32[1]{0}', space=sflag, size = 0x4, scoped, tag = 'scoped memory for tpu_custom_call.1']
    %14 = vsyncpa [#allocation3], 0
    // Predicated region
    $region2: #{tpu_custom_call.1} parent=1 // pred_check
      _
    $region3: #{tpu_custom_call.1} parent=1 // pred_check_branch
      %16 = sbr.rel (0) target = $region5
    $region4: #{tpu_custom_call.1} parent=1 // pred_region
      _
    $region5: #{tpu_custom_call.1} parent=1 // pred_fallthru
      _
    // Predicated region
    $region6: #{tpu_custom_call.1} parent=1 // pred_check
      _
    $region7: #{tpu_custom_call.1} parent=1 // pred_check_branch
      %18 = sbr.rel (0) target = $region9
    $region8: #{tpu_custom_call.1} parent=1 // pred_region
      _
    $region9: #{tpu_custom_call.1} parent=1 // pred_fallthru
      _
    // Predicated region
    $region10: #{tpu_custom_call.1} parent=1 // pred_check
      _
    $region11: #{tpu_custom_call.1} parent=1 // pred_check_branch
      %20 = sbr.rel (0) target = $region13
    $region12: #{tpu_custom_call.1} parent=1 // pred_region
      _
    $region13: #{tpu_custom_call.1} parent=1 // pred_fallthru
      _
    // Predicated region
    $region14: #{tpu_custom_call.1} parent=1 // pred_check
      _
    $region15: #{tpu_custom_call.1} parent=1 // pred_check_branch
      %22 = sbr.rel (0) target = $region17
    $region16: #{tpu_custom_call.1} parent=1 // pred_region
      %24 = vsyncadd [#allocation3], 0
      %s25 = sshll.u32 %s3, 4
      %s26 = int_to_ptr.hbm [resolvable:$true] %s25
      %s27 = sshll.u32 [#allocation2], 4
      %s28 = int_to_ptr.vmem [resolvable:$true] %s27
      %33 = dma.hbm_to_vmem [thread:$0]  %s26, 4096, %s28, [#allocation3], 128, 128, 8
    $region17: #{tpu_custom_call.1} parent=1 // pred_fallthru
      _
    // Predicated region
    $region18: #{tpu_custom_call.1} parent=1 // pred_check
      _
    $region19: #{tpu_custom_call.1} parent=1 // pred_check_branch
      %35 = sbr.rel (0) target = $region21
    $region20: #{tpu_custom_call.1} parent=1 // pred_region
      _
    $region21: #{tpu_custom_call.1} parent=1 // pred_fallthru
      _
    // Predicated region
    $region22: #{tpu_custom_call.1} parent=1 // pred_check
      _
    $region23: #{tpu_custom_call.1} parent=1 // pred_check_branch
      %37 = sbr.rel (0) target = $region25
    $region24: #{tpu_custom_call.1} parent=1 // pred_region
      _
    $region25: #{tpu_custom_call.1} parent=1 // pred_fallthru
      _
    // Predicated region
    $region26: #{tpu_custom_call.1} parent=1 // pred_check
      _
    $region27: #{tpu_custom_call.1} parent=1 // pred_check_branch
      %39 = sbr.rel (0) target = $region29
    $region28: #{tpu_custom_call.1} parent=1 // pred_region
      _
    $region29: #{tpu_custom_call.1} parent=1 // pred_fallthru
      _
    // Predicated region
    $region30: #{tpu_custom_call.1} parent=1 // pred_check
      _
    $region31: #{tpu_custom_call.1} parent=1 // pred_check_branch
      %41 = sbr.rel (0) target = $region33
    $region32: #{tpu_custom_call.1} parent=1 // pred_region
      _
    $region33: #{tpu_custom_call.1} parent=1 // pred_fallthru
      _
    // Predicated region
    $region34: #{tpu_custom_call.1} parent=1 // pred_check
      _
    $region35: #{tpu_custom_call.1} parent=1 // pred_check_branch
      %43 = sbr.rel (0) target = $region37
    $region36: #{tpu_custom_call.1} parent=1 // pred_region
      _
    $region37: #{tpu_custom_call.1} parent=1 // pred_fallthru
      _
    // Predicated region
    $region38: #{tpu_custom_call.1} parent=1 // pred_check
      _
    $region39: #{tpu_custom_call.1} parent=1 // pred_check_branch
      %45 = sbr.rel (0) target = $region41
    $region40: #{tpu_custom_call.1} parent=1 // pred_region
      %47 = dma.done [#allocation3], 4096
    $region41: #{tpu_custom_call.1} parent=1 // pred_fallthru
      _
    %v49 = vld [vmem:[%s0] sm:$0xff]
    %v50 = vpack.c.bf16 %v49, %v49
    %v51 = vld [vmem:[%s1] sm:$0xff]
    %v52 = vld [vmem:[%s1 + $0x8] sm:$0xff]
    %v55 = vunpack.c.l.b16 %v51
    %v56 = vunpack.c.h.b16 %v51
    %v57 = vunpack.c.l.b16 %v52
    %v58 = vunpack.c.h.b16 %v52
    %v59 = vpack.c.b16 %v57, %v55
    %v60 = vpack.c.b16 %v58, %v56
    %vm63 = vcmask 130048
    %v65 = vsel %vm63, %v50, 0
    %67 = vmatpush.bf16.msra.mxu0 0
    %68 = vmatpush.bf16.msra.mxu0 0
    %69 = vmatpush.bf16.msra.mxu0 0
    %70 = vmatpush.bf16.msra.mxu0 0
    %71 = vmatpush.bf16.msra.mxu0 0
    %72 = vmatpush.bf16.msra.mxu0 0
    %73 = vmatpush.bf16.msra.mxu0 0
    %74 = vmatpush.bf16.msra.mxu0 %v59
    %75 = vmatmul.bf16.gmra.mxu0 %v65
    %v76 = vpop.f32.mrf.mxu0
    %v77 = vadd.f32 0.0, %v76
    %v78 = vpop.f32.mrf.mxu0
    %79 = vdwg.mxu0
    %80 = vmatpush.bf16.msra.mxu0 0
    %81 = vmatpush.bf16.msra.mxu0 0
    %82 = vmatpush.bf16.msra.mxu0 0
    %83 = vmatpush.bf16.msra.mxu0 0
    %84 = vmatpush.bf16.msra.mxu0 0
    %85 = vmatpush.bf16.msra.mxu0 0
    %86 = vmatpush.bf16.msra.mxu0 0
    %87 = vmatpush.bf16.msra.mxu0 %v60
    %88 = vmatmul.bf16.gmra.mxu0 %v65
    %v89 = vpop.f32.mrf.mxu0
    %v90 = vadd.f32 0.0, %v89
    %v91 = vpop.f32.mrf.mxu0
    %92 = vdwg.mxu0
    %v93 = vpack.c.bf16 %v90, %v77
    %v94 = vld [vmem:[%s2] sm:$0x3]
    %v96 = vperm.slane %v94, 0
    %v97 = vperm.slane %v94, 1
    %v100 = vpack.c.bf16 %v97, %v96
    %v102 = vunpack.c.l.b16 %v100
    %v103 = vunpack.c.h.b16 %v100
    %v104 = vpack.c.b16 %v102, %v102
    %v105 = vpack.c.b16 %v103, %v103
    %v107 = vpack.i.b16 %v104, %v104
    %v109 = vperm.slane %v107, 0
    %v111 = vpack.i.b16 %v105, %v105
    %v113 = vperm.slane %v111, 0
    %v114 = vunpack.c.l.bf16 %v93
    %v115 = vunpack.c.h.bf16 %v93
    %v116 = vunpack.c.l.bf16 %v109
    %v117 = vunpack.c.l.bf16 %v113
    %v118 = vadd.f32 %v114, %v116
    %v119 = vadd.f32 %v115, %v117
    %v120 = vpack.c.bf16 %v119, %v118
    %v121 = vunpack.c.l.bf16 %v120
    %v122 = vunpack.c.h.bf16 %v120
    %v123 = vmax.f32 %v121, 0.0
    %v124 = vmax.f32 %v122, 0.0
    %v125 = vpack.c.bf16 %v123, %v123
    %v126 = vpack.c.bf16 %v124, %v124
    %v127 = vld [vmem:[#allocation2] sm:$0xff]
    %v128 = vld [vmem:[#allocation2 + $0x8] sm:$0xff]
    %v129 = vld [vmem:[#allocation2 + $0x10] sm:$0xff]
    %v130 = vld [vmem:[#allocation2 + $0x18] sm:$0xff]
    %v131 = vld [vmem:[#allocation2 + $0x20] sm:$0xff]
    %v132 = vld [vmem:[#allocation2 + $0x28] sm:$0xff]
    %v133 = vld [vmem:[#allocation2 + $0x30] sm:$0xff]
    %v134 = vld [vmem:[#allocation2 + $0x38] sm:$0xff]
    %v135 = vld [vmem:[#allocation2 + $0x40] sm:$0xff]
    %v136 = vld [vmem:[#allocation2 + $0x48] sm:$0xff]
    %v137 = vld [vmem:[#allocation2 + $0x50] sm:$0xff]
    %v138 = vld [vmem:[#allocation2 + $0x58] sm:$0xff]
    %v139 = vld [vmem:[#allocation2 + $0x60] sm:$0xff]
    %v140 = vld [vmem:[#allocation2 + $0x68] sm:$0xff]
    %v141 = vld [vmem:[#allocation2 + $0x70] sm:$0xff]
    %v142 = vld [vmem:[#allocation2 + $0x78] sm:$0xff]
    %v143 = vld [vmem:[#allocation2 + $0x80] sm:$0xff]
    %v144 = vld [vmem:[#allocation2 + $0x88] sm:$0xff]
    %v145 = vld [vmem:[#allocation2 + $0x90] sm:$0xff]
    %v146 = vld [vmem:[#allocation2 + $0x98] sm:$0xff]
    %v147 = vld [vmem:[#allocation2 + $0xa0] sm:$0xff]
    %v148 = vld [vmem:[#allocation2 + $0xa8] sm:$0xff]
    %v149 = vld [vmem:[#allocation2 + $0xb0] sm:$0xff]
    %v150 = vld [vmem:[#allocation2 + $0xb8] sm:$0xff]
    %v151 = vld [vmem:[#allocation2 + $0xc0] sm:$0xff]
    %v152 = vld [vmem:[#allocation2 + $0xc8] sm:$0xff]
    %v153 = vld [vmem:[#allocation2 + $0xd0] sm:$0xff]
    %v154 = vld [vmem:[#allocation2 + $0xd8] sm:$0xff]
    %v155 = vld [vmem:[#allocation2 + $0xe0] sm:$0xff]
    %v156 = vld [vmem:[#allocation2 + $0xe8] sm:$0xff]
    %v157 = vld [vmem:[#allocation2 + $0xf0] sm:$0xff]
    %v158 = vld [vmem:[#allocation2 + $0xf8] sm:$0xff]
    %v191 = vunpack.c.l.b16 %v127
    %v192 = vunpack.c.h.b16 %v127
    %v193 = vunpack.c.l.b16 %v128
    %v194 = vunpack.c.h.b16 %v128
    %v195 = vunpack.c.l.b16 %v129
    %v196 = vunpack.c.h.b16 %v129
    %v197 = vunpack.c.l.b16 %v130
    %v198 = vunpack.c.h.b16 %v130
    %v199 = vunpack.c.l.b16 %v131
    %v200 = vunpack.c.h.b16 %v131
    %v201 = vunpack.c.l.b16 %v132
    %v202 = vunpack.c.h.b16 %v132
    %v203 = vunpack.c.l.b16 %v133
    %v204 = vunpack.c.h.b16 %v133
    %v205 = vunpack.c.l.b16 %v134
    %v206 = vunpack.c.h.b16 %v134
    %v207 = vunpack.c.l.b16 %v135
    %v208 = vunpack.c.h.b16 %v135
    %v209 = vunpack.c.l.b16 %v136
    %v210 = vunpack.c.h.b16 %v136
    %v211 = vunpack.c.l.b16 %v137
    %v212 = vunpack.c.h.b16 %v137
    %v213 = vunpack.c.l.b16 %v138
    %v214 = vunpack.c.h.b16 %v138
    %v215 = vunpack.c.l.b16 %v139
    %v216 = vunpack.c.h.b16 %v139
    %v217 = vunpack.c.l.b16 %v140
    %v218 = vunpack.c.h.b16 %v140
    %v219 = vunpack.c.l.b16 %v141
    %v220 = vunpack.c.h.b16 %v141
    %v221 = vunpack.c.l.b16 %v142
    %v222 = vunpack.c.h.b16 %v142
    %v223 = vunpack.c.l.b16 %v143
    %v224 = vunpack.c.h.b16 %v143
    %v225 = vunpack.c.l.b16 %v144
    %v226 = vunpack.c.h.b16 %v144
    %v227 = vunpack.c.l.b16 %v145
    %v228 = vunpack.c.h.b16 %v145
    %v229 = vunpack.c.l.b16 %v146
    %v230 = vunpack.c.h.b16 %v146
    %v231 = vunpack.c.l.b16 %v147
    %v232 = vunpack.c.h.b16 %v147
    %v233 = vunpack.c.l.b16 %v148
    %v234 = vunpack.c.h.b16 %v148
    %v235 = vunpack.c.l.b16 %v149
    %v236 = vunpack.c.h.b16 %v149
    %v237 = vunpack.c.l.b16 %v150
    %v238 = vunpack.c.h.b16 %v150
    %v239 = vunpack.c.l.b16 %v151
    %v240 = vunpack.c.h.b16 %v151
    %v241 = vunpack.c.l.b16 %v152
    %v242 = vunpack.c.h.b16 %v152
    %v243 = vunpack.c.l.b16 %v153
    %v244 = vunpack.c.h.b16 %v153
    %v245 = vunpack.c.l.b16 %v154
    %v246 = vunpack.c.h.b16 %v154
    %v247 = vunpack.c.l.b16 %v155
    %v248 = vunpack.c.h.b16 %v155
    %v249 = vunpack.c.l.b16 %v156
    %v250 = vunpack.c.h.b16 %v156
    %v251 = vunpack.c.l.b16 %v157
    %v252 = vunpack.c.h.b16 %v157
    %v253 = vunpack.c.l.b16 %v158
    %v254 = vunpack.c.h.b16 %v158
    %v255 = vpack.c.b16 %v193, %v191
    %v256 = vpack.c.b16 %v194, %v192
    %v257 = vpack.c.b16 %v197, %v195
    %v258 = vpack.c.b16 %v198, %v196
    %v259 = vpack.c.b16 %v201, %v199
    %v260 = vpack.c.b16 %v202, %v200
    %v261 = vpack.c.b16 %v205, %v203
    %v262 = vpack.c.b16 %v206, %v204
    %v263 = vpack.c.b16 %v209, %v207
    %v264 = vpack.c.b16 %v210, %v208
    %v265 = vpack.c.b16 %v213, %v211
    %v266 = vpack.c.b16 %v214, %v212
    %v267 = vpack.c.b16 %v217, %v215
    %v268 = vpack.c.b16 %v218, %v216
    %v269 = vpack.c.b16 %v221, %v219
    %v270 = vpack.c.b16 %v222, %v220
    %v271 = vpack.c.b16 %v225, %v223
    %v272 = vpack.c.b16 %v226, %v224
    %v273 = vpack.c.b16 %v229, %v227
    %v274 = vpack.c.b16 %v230, %v228
    %v275 = vpack.c.b16 %v233, %v231
    %v276 = vpack.c.b16 %v234, %v232
    %v277 = vpack.c.b16 %v237, %v235
    %v278 = vpack.c.b16 %v238, %v236
    %v279 = vpack.c.b16 %v241, %v239
    %v280 = vpack.c.b16 %v242, %v240
    %v281 = vpack.c.b16 %v245, %v243
    %v282 = vpack.c.b16 %v246, %v244
    %v283 = vpack.c.b16 %v249, %v247
    %v284 = vpack.c.b16 %v250, %v248
    %v285 = vpack.c.b16 %v253, %v251
    %v286 = vpack.c.b16 %v254, %v252
    %319 = vmatpush.bf16.msra.mxu0 %v269
    %320 = vmatpush.bf16.msra.mxu0 %v267
    %321 = vmatpush.bf16.msra.mxu0 %v265
    %322 = vmatpush.bf16.msra.mxu0 %v263
    %323 = vmatpush.bf16.msra.mxu0 %v261
    %324 = vmatpush.bf16.msra.mxu0 %v259
    %325 = vmatpush.bf16.msra.mxu0 %v257
    %326 = vmatpush.bf16.msra.mxu0 %v255
    %327 = vmatmul.bf16.gmra.mxu0 %v125
    %v328 = vpop.f32.mrf.mxu0
    %v329 = vadd.f32 0.0, %v328
    %v330 = vpop.f32.mrf.mxu0
    %331 = vdwg.mxu0
    %332 = vmatpush.bf16.msra.mxu0 %v285
    %333 = vmatpush.bf16.msra.mxu0 %v283
    %334 = vmatpush.bf16.msra.mxu0 %v281
    %335 = vmatpush.bf16.msra.mxu0 %v279
    %336 = vmatpush.bf16.msra.mxu0 %v277
    %337 = vmatpush.bf16.msra.mxu0 %v275
    %338 = vmatpush.bf16.msra.mxu0 %v273
    %339 = vmatpush.bf16.msra.mxu0 %v271
    %340 = vmatmul.bf16.gmra.mxu0 %v126
    %v341 = vpop.f32.mrf.mxu0
    %v342 = vadd.f32 %v329, %v341
    %v343 = vpop.f32.mrf.mxu0
    %344 = vdwg.mxu0
    %345 = vmatpush.bf16.msra.mxu0 %v270
    %346 = vmatpush.bf16.msra.mxu0 %v268
    %347 = vmatpush.bf16.msra.mxu0 %v266
    %348 = vmatpush.bf16.msra.mxu0 %v264
    %349 = vmatpush.bf16.msra.mxu0 %v262
    %350 = vmatpush.bf16.msra.mxu0 %v260
    %351 = vmatpush.bf16.msra.mxu0 %v258
    %352 = vmatpush.bf16.msra.mxu0 %v256
    %353 = vmatmul.bf16.gmra.mxu0 %v125
    %v354 = vpop.f32.mrf.mxu0
    %v355 = vadd.f32 0.0, %v354
    %v356 = vpop.f32.mrf.mxu0
    %357 = vdwg.mxu0
    %358 = vmatpush.bf16.msra.mxu0 %v286
    %359 = vmatpush.bf16.msra.mxu0 %v284
    %360 = vmatpush.bf16.msra.mxu0 %v282
    %361 = vmatpush.bf16.msra.mxu0 %v280
    %362 = vmatpush.bf16.msra.mxu0 %v278
    %363 = vmatpush.bf16.msra.mxu0 %v276
    %364 = vmatpush.bf16.msra.mxu0 %v274
    %365 = vmatpush.bf16.msra.mxu0 %v272
    %366 = vmatmul.bf16.gmra.mxu0 %v126
    %v367 = vpop.f32.mrf.mxu0
    %v368 = vadd.f32 %v355, %v367
    %v369 = vpop.f32.mrf.mxu0
    %370 = vdwg.mxu0
    %v371 = vpack.c.bf16 %v368, %v342
    %v372 = vld [vmem:[%s4] sm:$0x3]
    %v374 = vperm.slane %v372, 0
    %v375 = vperm.slane %v372, 1
    %v378 = vpack.c.bf16 %v375, %v374
    %v380 = vunpack.c.l.b16 %v378
    %v381 = vunpack.c.h.b16 %v378
    %v382 = vpack.c.b16 %v380, %v380
    %v383 = vpack.c.b16 %v381, %v381
    %v385 = vpack.i.b16 %v382, %v382
    %v387 = vperm.slane %v385, 0
    %v389 = vpack.i.b16 %v383, %v383
    %v391 = vperm.slane %v389, 0
    %v392 = vunpack.c.l.bf16 %v371
    %v393 = vunpack.c.h.bf16 %v371
    %v394 = vunpack.c.l.bf16 %v387
    %v395 = vunpack.c.l.bf16 %v391
    %v396 = vadd.f32 %v392, %v394
    %v397 = vadd.f32 %v393, %v395
    %v398 = vpack.c.bf16 %v397, %v396
    %v399 = vunpack.c.l.bf16 %v398
    %v400 = vunpack.c.h.bf16 %v398
    %v401 = vmax.f32 %v399, 0.0
    %v402 = vmax.f32 %v400, 0.0
    %v403 = vpack.c.bf16 %v401, %v401
    %v404 = vpack.c.bf16 %v402, %v402
    %v405 = vld [vmem:[%s5] sm:$0xf]
    %v406 = vld [vmem:[%s5 + $0x4] sm:$0xf]
    %v407 = vld [vmem:[%s5 + $0x8] sm:$0xf]
    %v408 = vld [vmem:[%s5 + $0xc] sm:$0xf]
    %v409 = vld [vmem:[%s5 + $0x10] sm:$0xf]
    %v410 = vld [vmem:[%s5 + $0x14] sm:$0xf]
    %v411 = vld [vmem:[%s5 + $0x18] sm:$0xf]
    %v412 = vld [vmem:[%s5 + $0x1c] sm:$0xf]
    %v413 = vld [vmem:[%s5 + $0x20] sm:$0xf]
    %v414 = vld [vmem:[%s5 + $0x24] sm:$0xf]
    %v415 = vld [vmem:[%s5 + $0x28] sm:$0xf]
    %v416 = vld [vmem:[%s5 + $0x2c] sm:$0xf]
    %v417 = vld [vmem:[%s5 + $0x30] sm:$0xf]
    %v418 = vld [vmem:[%s5 + $0x34] sm:$0xf]
    %v419 = vld [vmem:[%s5 + $0x38] sm:$0xf]
    %v420 = vld [vmem:[%s5 + $0x3c] sm:$0xf]
    %v421 = vld [vmem:[%s5 + $0x40] sm:$0xf]
    %v422 = vld [vmem:[%s5 + $0x44] sm:$0xf]
    %v423 = vld [vmem:[%s5 + $0x48] sm:$0xf]
    %v424 = vld [vmem:[%s5 + $0x4c] sm:$0xf]
    %v425 = vld [vmem:[%s5 + $0x50] sm:$0xf]
    %v426 = vld [vmem:[%s5 + $0x54] sm:$0xf]
    %v427 = vld [vmem:[%s5 + $0x58] sm:$0xf]
    %v428 = vld [vmem:[%s5 + $0x5c] sm:$0xf]
    %v429 = vld [vmem:[%s5 + $0x60] sm:$0xf]
    %v430 = vld [vmem:[%s5 + $0x64] sm:$0xf]
    %v431 = vld [vmem:[%s5 + $0x68] sm:$0xf]
    %v432 = vld [vmem:[%s5 + $0x6c] sm:$0xf]
    %v433 = vld [vmem:[%s5 + $0x70] sm:$0xf]
    %v434 = vld [vmem:[%s5 + $0x74] sm:$0xf]
    %v435 = vld [vmem:[%s5 + $0x78] sm:$0xf]
    %v436 = vld [vmem:[%s5 + $0x7c] sm:$0xf]
    %v437 = vld [vmem:[%s6] sm:$0x1]
    %v439 = vperm.slane %v437, 0
    %v473 = vunpack.c.l.b16 %v405
    %v474 = vunpack.c.l.b16 %v406
    %v475 = vunpack.c.l.b16 %v407
    %v476 = vunpack.c.l.b16 %v408
    %v477 = vunpack.c.l.b16 %v409
    %v478 = vunpack.c.l.b16 %v410
    %v479 = vunpack.c.l.b16 %v411
    %v480 = vunpack.c.l.b16 %v412
    %v481 = vunpack.c.l.b16 %v413
    %v482 = vunpack.c.l.b16 %v414
    %v483 = vunpack.c.l.b16 %v415
    %v484 = vunpack.c.l.b16 %v416
    %v485 = vunpack.c.l.b16 %v417
    %v486 = vunpack.c.l.b16 %v418
    %v487 = vunpack.c.l.b16 %v419
    %v488 = vunpack.c.l.b16 %v420
    %v489 = vunpack.c.l.b16 %v421
    %v490 = vunpack.c.l.b16 %v422
    %v491 = vunpack.c.l.b16 %v423
    %v492 = vunpack.c.l.b16 %v424
    %v493 = vunpack.c.l.b16 %v425
    %v494 = vunpack.c.l.b16 %v426
    %v495 = vunpack.c.l.b16 %v427
    %v496 = vunpack.c.l.b16 %v428
    %v497 = vunpack.c.l.b16 %v429
    %v498 = vunpack.c.l.b16 %v430
    %v499 = vunpack.c.l.b16 %v431
    %v500 = vunpack.c.l.b16 %v432
    %v501 = vunpack.c.l.b16 %v433
    %v502 = vunpack.c.l.b16 %v434
    %v503 = vunpack.c.l.b16 %v435
    %v504 = vunpack.c.l.b16 %v436
    %v505 = vpack.c.b16 %v474, %v473
    %v506 = vpack.c.b16 %v476, %v475
    %v507 = vpack.c.b16 %v478, %v477
    %v508 = vpack.c.b16 %v480, %v479
    %v509 = vpack.c.b16 %v482, %v481
    %v510 = vpack.c.b16 %v484, %v483
    %v511 = vpack.c.b16 %v486, %v485
    %v512 = vpack.c.b16 %v488, %v487
    %v513 = vpack.c.b16 %v490, %v489
    %v514 = vpack.c.b16 %v492, %v491
    %v515 = vpack.c.b16 %v494, %v493
    %v516 = vpack.c.b16 %v496, %v495
    %v517 = vpack.c.b16 %v498, %v497
    %v518 = vpack.c.b16 %v500, %v499
    %v519 = vpack.c.b16 %v502, %v501
    %v520 = vpack.c.b16 %v504, %v503
    %537 = vmatpush.bf16.msra.mxu0 %v512
    %538 = vmatpush.bf16.msra.mxu0 %v511
    %539 = vmatpush.bf16.msra.mxu0 %v510
    %540 = vmatpush.bf16.msra.mxu0 %v509
    %541 = vmatpush.bf16.msra.mxu0 %v508
    %542 = vmatpush.bf16.msra.mxu0 %v507
    %543 = vmatpush.bf16.msra.mxu0 %v506
    %544 = vmatpush.bf16.msra.mxu0 %v505
    %545 = vmatmul.bf16.gmra.mxu0 %v403
    %v546 = vpop.f32.mrf.mxu0
    %v547 = vadd.f32 %v439, %v546
    %v548 = vpop.f32.mrf.mxu0
    %549 = vdwg.mxu0
    %550 = vmatpush.bf16.msra.mxu0 %v520
    %551 = vmatpush.bf16.msra.mxu0 %v519
    %552 = vmatpush.bf16.msra.mxu0 %v518
    %553 = vmatpush.bf16.msra.mxu0 %v517
    %554 = vmatpush.bf16.msra.mxu0 %v516
    %555 = vmatpush.bf16.msra.mxu0 %v515
    %556 = vmatpush.bf16.msra.mxu0 %v514
    %557 = vmatpush.bf16.msra.mxu0 %v513
    %558 = vmatmul.bf16.gmra.mxu0 %v404
    %v559 = vpop.f32.mrf.mxu0
    %v560 = vadd.f32 %v547, %v559
    %v561 = vpop.f32.mrf.mxu0
    %562 = vdwg.mxu0
    %v563 = vtanh.pop %v560
    %v564 = vld [vmem:[%s7] sm:$0x1]
    %v566 = vperm.slane %v564, 0
    %v568 = vmul.f32 %v563, %v566
    %v569 = vld [vmem:[%s8] sm:$0x1]
    %v571 = vperm.slane %v569, 0
    %v573 = vadd.f32 %v568, %v571
    %vm574 = vcmask 31744
    %575 = vst.msk [vmem:[%s9] sm:$0xff] %vm574, %v573
    // Predicated region
    $region42: #{tpu_custom_call.1} parent=1 // pred_check
      _
    $region43: #{tpu_custom_call.1} parent=1 // pred_check_branch
      %577 = sbr.rel (0) target = $region45
    $region44: #{tpu_custom_call.1} parent=1 // pred_region
      _
    $region45: #{tpu_custom_call.1} parent=1 // pred_fallthru
      _
    // Predicated region
    $region46: #{tpu_custom_call.1} parent=1 // pred_check
      _
    $region47: #{tpu_custom_call.1} parent=1 // pred_check_branch
      %579 = sbr.rel (0) target = $region49
    $region48: #{tpu_custom_call.1} parent=1 // pred_region
      _
    $region49: #{tpu_custom_call.1} parent=1 // pred_fallthru
      _
    %580 = vsyncpa [#allocation3], 1

// kernel: tpu_custom_call.1
$region0: #{tpu_custom_call.1}
  #allocation0 [shape = 'u32[]', space=smem, size = 0x4, offset = 0x4, fixed_abs, tag = 'smem constant byte address 0x4 - core index']
  #allocation1 [shape = 'u32[72,128]{1,0:T(1,128)}', space=vmem, size = 0x9000, scoped, tag = 'internal scratch']
  %s0 = inlined_call_operand.vmem [shape: f32[8,16], index: 0, kind: input, shape index: {}]
  %s1 = inlined_call_operand.vmem [shape: bf16[16,256], index: 1, kind: input, shape index: {}]
  %s2 = inlined_call_operand.vmem [shape: f32[1,256], index: 2, kind: input, shape index: {}]
  %s3 = inlined_call_operand.hbm [shape: bf16[256,256], index: 3, kind: input, shape index: {}]
  %s4 = inlined_call_operand.vmem [shape: f32[1,256], index: 4, kind: input, shape index: {}]
  %s5 = inlined_call_operand.vmem [shape: bf16[256,4], index: 5, kind: input, shape index: {}]
  %s6 = inlined_call_operand.vmem [shape: f32[1,4], index: 6, kind: input, shape index: {}]
  %s7 = inlined_call_operand.vmem [shape: f32[1,4], index: 7, kind: input, shape index: {}]
  %s8 = inlined_call_operand.vmem [shape: f32[1,4], index: 8, kind: input, shape index: {}]
  %s9 = inlined_call_operand.vmem [shape: f32[8,4], index: 9, kind: output, shape index: {}]
  %s10 = sld [smem:[#allocation0]]
  $region50: #{tpu_custom_call.1} parent=0
    _
  %s12 = ssub.s32 1, %s10
  %s13 = scalar_select 0, %s12, %s10
  $region1: #{tpu_custom_call.1} parent=0
    #allocation2 [shape = 'u8[131072]{0}', space=vmem, size = 0x20000, scoped, tag = 'input window, operand 3, single buffered']
    #allocation3 [shape = 's32[1]{0}', space=sflag, size = 0x4, scoped, tag = 'scoped memory for tpu_custom_call.1']
    %14 = vsyncpa [#allocation3], 0
    // Predicated region
    $region2: #{tpu_custom_call.1} parent=1 // pred_check
      _
    $region3: #{tpu_custom_call.1} parent=1 // pred_check_branch
      %16 = sbr.rel (0) target = $region5
    $region4: #{tpu_custom_call.1} parent=1 // pred_region
      _
    $region5: #{tpu_custom_call.1} parent=1 // pred_fallthru
      _
    // Predicated region
    $region6: #{tpu_custom_call.1} parent=1 // pred_check
      _
    $region7: #{tpu_custom_call.1} parent=1 // pred_check_branch
      %18 = sbr.rel (0) target = $region9
    $region8: #{tpu_custom_call.1} parent=1 // pred_region
      _
    $region9: #{tpu_custom_call.1} parent=1 // pred_fallthru
      _
    // Predicated region
    $region10: #{tpu_custom_call.1} parent=1 // pred_check
      _
    $region11: #{tpu_custom_call.1} parent=1 // pred_check_branch
      %20 = sbr.rel (0) target = $region13
    $region12: #{tpu_custom_call.1} parent=1 // pred_region
      _
    $region13: #{tpu_custom_call.1} parent=1 // pred_fallthru
      _
    // Predicated region
    $region14: #{tpu_custom_call.1} parent=1 // pred_check
      _
    $region15: #{tpu_custom_call.1} parent=1 // pred_check_branch
      %22 = sbr.rel (0) target = $region17
    $region16: #{tpu_custom_call.1} parent=1 // pred_region
      %24 = vsyncadd [#allocation3], 0
      %s25 = sshll.u32 %s3, 4
      %s26 = int_to_ptr.hbm [resolvable:$true] %s25
      %s27 = sshll.u32 [#allocation2], 4
      %s28 = int_to_ptr.vmem [resolvable:$true] %s27
      %33 = dma.hbm_to_vmem [thread:$0]  %s26, 4096, %s28, [#allocation3], 128, 128, 8
    $region17: #{tpu_custom_call.1} parent=1 // pred_fallthru
      _
    // Predicated region
    $region18: #{tpu_custom_call.1} parent=1 // pred_check
      _
    $region19: #{tpu_custom_call.1} parent=1 // pred_check_branch
      %35 = sbr.rel (0) target = $region21
    $region20: #{tpu_custom_call.1} parent=1 // pred_region
      _
    $region21: #{tpu_custom_call.1} parent=1 // pred_fallthru
      _
    // Predicated region
    $region22: #{tpu_custom_call.1} parent=1 // pred_check
      _
    $region23: #{tpu_custom_call.1} parent=1 // pred_check_branch
      %37 = sbr.rel (0) target = $region25
    $region24: #{tpu_custom_call.1} parent=1 // pred_region
      _
    $region25: #{tpu_custom_call.1} parent=1 // pred_fallthru
      _
    // Predicated region
    $region26: #{tpu_custom_call.1} parent=1 // pred_check
      _
    $region27: #{tpu_custom_call.1} parent=1 // pred_check_branch
      %39 = sbr.rel (0) target = $region29
    $region28: #{tpu_custom_call.1} parent=1 // pred_region
      _
    $region29: #{tpu_custom_call.1} parent=1 // pred_fallthru
      _
    // Predicated region
    $region30: #{tpu_custom_call.1} parent=1 // pred_check
      _
    $region31: #{tpu_custom_call.1} parent=1 // pred_check_branch
      %41 = sbr.rel (0) target = $region33
    $region32: #{tpu_custom_call.1} parent=1 // pred_region
      _
    $region33: #{tpu_custom_call.1} parent=1 // pred_fallthru
      _
    // Predicated region
    $region34: #{tpu_custom_call.1} parent=1 // pred_check
      _
    $region35: #{tpu_custom_call.1} parent=1 // pred_check_branch
      %43 = sbr.rel (0) target = $region37
    $region36: #{tpu_custom_call.1} parent=1 // pred_region
      _
    $region37: #{tpu_custom_call.1} parent=1 // pred_fallthru
      _
    // Predicated region
    $region38: #{tpu_custom_call.1} parent=1 // pred_check
      _
    $region39: #{tpu_custom_call.1} parent=1 // pred_check_branch
      %45 = sbr.rel (0) target = $region41
    $region40: #{tpu_custom_call.1} parent=1 // pred_region
      %47 = dma.done [#allocation3], 4096
    $region41: #{tpu_custom_call.1} parent=1 // pred_fallthru
      _
    %v49 = vld [vmem:[%s0] sm:$0xff]
    %v50 = vpack.c.bf16 %v49, %v49
    %v51 = vld [vmem:[%s1] sm:$0xff]
    %v52 = vld [vmem:[%s1 + $0x8] sm:$0xff]
    %v55 = vunpack.c.l.b16 %v51
    %v56 = vunpack.c.h.b16 %v51
    %v57 = vunpack.c.l.b16 %v52
    %v58 = vunpack.c.h.b16 %v52
    %v59 = vpack.c.b16 %v57, %v55
    %v60 = vpack.c.b16 %v58, %v56
    %vm63 = vcmask 130048
    %v65 = vsel %vm63, %v50, 0
    %67 = vmatpush.bf16.msra.mxu0 0
    %68 = vmatpush.bf16.msra.mxu0 0
    %69 = vmatpush.bf16.msra.mxu0 0
    %70 = vmatpush.bf16.msra.mxu0 0
    %71 = vmatpush.bf16.msra.mxu0 0
    %72 = vmatpush.bf16.msra.mxu0 0
    %73 = vmatpush.bf16.msra.mxu0 0
    %74 = vmatpush.bf16.msra.mxu0 %v59
    %75 = vmatmul.bf16.gmra.mxu0 %v65
    %v76 = vpop.f32.mrf.mxu0
    %v77 = vadd.f32 0.0, %v76
    %v78 = vpop.f32.mrf.mxu0
    %79 = vdwg.mxu0
    %80 = vmatpush.bf16.msra.mxu0 0
    %81 = vmatpush.bf16.msra.mxu0 0
    %82 = vmatpush.bf16.msra.mxu0 0
    %83 = vmatpush.bf16.msra.mxu0 0
    %84 = vmatpush.bf16.msra.mxu0 0
    %85 = vmatpush.bf16.msra.mxu0 0
    %86 = vmatpush.bf16.msra.mxu0 0
    %87 = vmatpush.bf16.msra.mxu0 %v60
    %88 = vmatmul.bf16.gmra.mxu0 %v65
    %v89 = vpop.f32.mrf.mxu0
    %v90 = vadd.f32 0.0, %v89
    %v91 = vpop.f32.mrf.mxu0
    %92 = vdwg.mxu0
    %v93 = vpack.c.bf16 %v90, %v77
    %v94 = vld [vmem:[%s2] sm:$0x3]
    %v96 = vperm.slane %v94, 0
    %v97 = vperm.slane %v94, 1
    %v100 = vpack.c.bf16 %v97, %v96
    %v102 = vunpack.c.l.b16 %v100
    %v103 = vunpack.c.h.b16 %v100
    %v104 = vpack.c.b16 %v102, %v102
    %v105 = vpack.c.b16 %v103, %v103
    %v107 = vpack.i.b16 %v104, %v104
    %v109 = vperm.slane %v107, 0
    %v111 = vpack.i.b16 %v105, %v105
    %v113 = vperm.slane %v111, 0
    %v114 = vunpack.c.l.bf16 %v93
    %v115 = vunpack.c.h.bf16 %v93
    %v116 = vunpack.c.l.bf16 %v109
    %v117 = vunpack.c.l.bf16 %v113
    %v118 = vadd.f32 %v114, %v116
    %v119 = vadd.f32 %v115, %v117
    %v120 = vpack.c.bf16 %v119, %v118
    %v121 = vunpack.c.l.bf16 %v120
    %v122 = vunpack.c.h.bf16 %v120
    %v123 = vmax.f32 %v121, 0.0
    %v124 = vmax.f32 %v122, 0.0
    %v125 = vpack.c.bf16 %v123, %v123
    %v126 = vpack.c.bf16 %v124, %v124
    %v127 = vld [vmem:[#allocation2] sm:$0xff]
    %v128 = vld [vmem:[#allocation2 + $0x8] sm:$0xff]
    %v129 = vld [vmem:[#allocation2 + $0x10] sm:$0xff]
    %v130 = vld [vmem:[#allocation2 + $0x18] sm:$0xff]
    %v131 = vld [vmem:[#allocation2 + $0x20] sm:$0xff]
    %v132 = vld [vmem:[#allocation2 + $0x28] sm:$0xff]
    %v133 = vld [vmem:[#allocation2 + $0x30] sm:$0xff]
    %v134 = vld [vmem:[#allocation2 + $0x38] sm:$0xff]
    %v135 = vld [vmem:[#allocation2 + $0x40] sm:$0xff]
    %v136 = vld [vmem:[#allocation2 + $0x48] sm:$0xff]
    %v137 = vld [vmem:[#allocation2 + $0x50] sm:$0xff]
    %v138 = vld [vmem:[#allocation2 + $0x58] sm:$0xff]
    %v139 = vld [vmem:[#allocation2 + $0x60] sm:$0xff]
    %v140 = vld [vmem:[#allocation2 + $0x68] sm:$0xff]
    %v141 = vld [vmem:[#allocation2 + $0x70] sm:$0xff]
    %v142 = vld [vmem:[#allocation2 + $0x78] sm:$0xff]
    %v143 = vld [vmem:[#allocation2 + $0x80] sm:$0xff]
    %v144 = vld [vmem:[#allocation2 + $0x88] sm:$0xff]
    %v145 = vld [vmem:[#allocation2 + $0x90] sm:$0xff]
    %v146 = vld [vmem:[#allocation2 + $0x98] sm:$0xff]
    %v147 = vld [vmem:[#allocation2 + $0xa0] sm:$0xff]
    %v148 = vld [vmem:[#allocation2 + $0xa8] sm:$0xff]
    %v149 = vld [vmem:[#allocation2 + $0xb0] sm:$0xff]
    %v150 = vld [vmem:[#allocation2 + $0xb8] sm:$0xff]
    %v151 = vld [vmem:[#allocation2 + $0xc0] sm:$0xff]
    %v152 = vld [vmem:[#allocation2 + $0xc8] sm:$0xff]
    %v153 = vld [vmem:[#allocation2 + $0xd0] sm:$0xff]
    %v154 = vld [vmem:[#allocation2 + $0xd8] sm:$0xff]
    %v155 = vld [vmem:[#allocation2 + $0xe0] sm:$0xff]
    %v156 = vld [vmem:[#allocation2 + $0xe8] sm:$0xff]
    %v157 = vld [vmem:[#allocation2 + $0xf0] sm:$0xff]
    %v158 = vld [vmem:[#allocation2 + $0xf8] sm:$0xff]
    %v191 = vunpack.c.l.b16 %v127
    %v192 = vunpack.c.h.b16 %v127
    %v193 = vunpack.c.l.b16 %v128
    %v194 = vunpack.c.h.b16 %v128
    %v195 = vunpack.c.l.b16 %v129
    %v196 = vunpack.c.h.b16 %v129
    %v197 = vunpack.c.l.b16 %v130
    %v198 = vunpack.c.h.b16 %v130
    %v199 = vunpack.c.l.b16 %v131
    %v200 = vunpack.c.h.b16 %v131
    %v201 = vunpack.c.l.b16 %v132
    %v202 = vunpack.c.h.b16 %v132
    %v203 = vunpack.c.l.b16 %v133
    %v204 = vunpack.c.h.b16 %v133
    %v205 = vunpack.c.l.b16 %v134
    %v206 = vunpack.c.h.b16 %v134
    %v207 = vunpack.c.l.b16 %v135
    %v208 = vunpack.c.h.b16 %v135
    %v209 = vunpack.c.l.b16 %v136
    %v210 = vunpack.c.h.b16 %v136
    %v211 = vunpack.c.l.b16 %v137
    %v212 = vunpack.c.h.b16 %v137
    %v213 = vunpack.c.l.b16 %v138
    %v214 = vunpack.c.h.b16 %v138
    %v215 = vunpack.c.l.b16 %v139
    %v216 = vunpack.c.h.b16 %v139
    %v217 = vunpack.c.l.b16 %v140
    %v218 = vunpack.c.h.b16 %v140
    %v219 = vunpack.c.l.b16 %v141
    %v220 = vunpack.c.h.b16 %v141
    %v221 = vunpack.c.l.b16 %v142
    %v222 = vunpack.c.h.b16 %v142
    %v223 = vunpack.c.l.b16 %v143
    %v224 = vunpack.c.h.b16 %v143
    %v225 = vunpack.c.l.b16 %v144
    %v226 = vunpack.c.h.b16 %v144
    %v227 = vunpack.c.l.b16 %v145
    %v228 = vunpack.c.h.b16 %v145
    %v229 = vunpack.c.l.b16 %v146
    %v230 = vunpack.c.h.b16 %v146
    %v231 = vunpack.c.l.b16 %v147
    %v232 = vunpack.c.h.b16 %v147
    %v233 = vunpack.c.l.b16 %v148
    %v234 = vunpack.c.h.b16 %v148
    %v235 = vunpack.c.l.b16 %v149
    %v236 = vunpack.c.h.b16 %v149
    %v237 = vunpack.c.l.b16 %v150
    %v238 = vunpack.c.h.b16 %v150
    %v239 = vunpack.c.l.b16 %v151
    %v240 = vunpack.c.h.b16 %v151
    %v241 = vunpack.c.l.b16 %v152
    %v242 = vunpack.c.h.b16 %v152
    %v243 = vunpack.c.l.b16 %v153
    %v244 = vunpack.c.h.b16 %v153
    %v245 = vunpack.c.l.b16 %v154
    %v246 = vunpack.c.h.b16 %v154
    %v247 = vunpack.c.l.b16 %v155
    %v248 = vunpack.c.h.b16 %v155
    %v249 = vunpack.c.l.b16 %v156
    %v250 = vunpack.c.h.b16 %v156
    %v251 = vunpack.c.l.b16 %v157
    %v252 = vunpack.c.h.b16 %v157
    %v253 = vunpack.c.l.b16 %v158
    %v254 = vunpack.c.h.b16 %v158
    %v255 = vpack.c.b16 %v193, %v191
    %v256 = vpack.c.b16 %v194, %v192
    %v257 = vpack.c.b16 %v197, %v195
    %v258 = vpack.c.b16 %v198, %v196
    %v259 = vpack.c.b16 %v201, %v199
    %v260 = vpack.c.b16 %v202, %v200
    %v261 = vpack.c.b16 %v205, %v203
    %v262 = vpack.c.b16 %v206, %v204
    %v263 = vpack.c.b16 %v209, %v207
    %v264 = vpack.c.b16 %v210, %v208
    %v265 = vpack.c.b16 %v213, %v211
    %v266 = vpack.c.b16 %v214, %v212
    %v267 = vpack.c.b16 %v217, %v215
    %v268 = vpack.c.b16 %v218, %v216
    %v269 = vpack.c.b16 %v221, %v219
    %v270 = vpack.c.b16 %v222, %v220
    %v271 = vpack.c.b16 %v225, %v223
    %v272 = vpack.c.b16 %v226, %v224
    %v273 = vpack.c.b16 %v229, %v227
    %v274 = vpack.c.b16 %v230, %v228
    %v275 = vpack.c.b16 %v233, %v231
    %v276 = vpack.c.b16 %v234, %v232
    %v277 = vpack.c.b16 %v237, %v235
    %v278 = vpack.c.b16 %v238, %v236
    %v279 = vpack.c.b16 %v241, %v239
    %v280 = vpack.c.b16 %v242, %v240
    %v281 = vpack.c.b16 %v245, %v243
    %v282 = vpack.c.b16 %v246, %v244
    %v283 = vpack.c.b16 %v249, %v247
    %v284 = vpack.c.b16 %v250, %v248
    %v285 = vpack.c.b16 %v253, %v251
    %v286 = vpack.c.b16 %v254, %v252
    %319 = vmatpush.bf16.msra.mxu0 %v269
    %320 = vmatpush.bf16.msra.mxu0 %v267
    %321 = vmatpush.bf16.msra.mxu0 %v265
    %322 = vmatpush.bf16.msra.mxu0 %v263
    %323 = vmatpush.bf16.msra.mxu0 %v261
    %324 = vmatpush.bf16.msra.mxu0 %v259
    %325 = vmatpush.bf16.msra.mxu0 %v257
    %326 = vmatpush.bf16.msra.mxu0 %v255
    %327 = vmatmul.bf16.gmra.mxu0 %v125
    %v328 = vpop.f32.mrf.mxu0
    %v329 = vadd.f32 0.0, %v328
    %v330 = vpop.f32.mrf.mxu0
    %331 = vdwg.mxu0
    %332 = vmatpush.bf16.msra.mxu0 %v285
    %333 = vmatpush.bf16.msra.mxu0 %v283
    %334 = vmatpush.bf16.msra.mxu0 %v281
    %335 = vmatpush.bf16.msra.mxu0 %v279
    %336 = vmatpush.bf16.msra.mxu0 %v277
    %337 = vmatpush.bf16.msra.mxu0 %v275
    %338 = vmatpush.bf16.msra.mxu0 %v273
    %339 = vmatpush.bf16.msra.mxu0 %v271
    %340 = vmatmul.bf16.gmra.mxu0 %v126
    %v341 = vpop.f32.mrf.mxu0
    %v342 = vadd.f32 %v329, %v341
    %v343 = vpop.f32.mrf.mxu0
    %344 = vdwg.mxu0
    %345 = vmatpush.bf16.msra.mxu0 %v270
    %346 = vmatpush.bf16.msra.mxu0 %v268
    %347 = vmatpush.bf16.msra.mxu0 %v266
    %348 = vmatpush.bf16.msra.mxu0 %v264
    %349 = vmatpush.bf16.msra.mxu0 %v262
    %350 = vmatpush.bf16.msra.mxu0 %v260
    %351 = vmatpush.bf16.msra.mxu0 %v258
    %352 = vmatpush.bf16.msra.mxu0 %v256
    %353 = vmatmul.bf16.gmra.mxu0 %v125
    %v354 = vpop.f32.mrf.mxu0
    %v355 = vadd.f32 0.0, %v354
    %v356 = vpop.f32.mrf.mxu0
    %357 = vdwg.mxu0
    %358 = vmatpush.bf16.msra.mxu0 %v286
    %359 = vmatpush.bf16.msra.mxu0 %v284
    %360 = vmatpush.bf16.msra.mxu0 %v282
    %361 = vmatpush.bf16.msra.mxu0 %v280
    %362 = vmatpush.bf16.msra.mxu0 %v278
    %363 = vmatpush.bf16.msra.mxu0 %v276
    %364 = vmatpush.bf16.msra.mxu0 %v274
    %365 = vmatpush.bf16.msra.mxu0 %v272
    %366 = vmatmul.bf16.gmra.mxu0 %v126
    %v367 = vpop.f32.mrf.mxu0
    %v368 = vadd.f32 %v355, %v367
    %v369 = vpop.f32.mrf.mxu0
    %370 = vdwg.mxu0
    %v371 = vpack.c.bf16 %v368, %v342
    %v372 = vld [vmem:[%s4] sm:$0x3]
    %v374 = vperm.slane %v372, 0
    %v375 = vperm.slane %v372, 1
    %v378 = vpack.c.bf16 %v375, %v374
    %v380 = vunpack.c.l.b16 %v378
    %v381 = vunpack.c.h.b16 %v378
    %v382 = vpack.c.b16 %v380, %v380
    %v383 = vpack.c.b16 %v381, %v381
    %v385 = vpack.i.b16 %v382, %v382
    %v387 = vperm.slane %v385, 0
    %v389 = vpack.i.b16 %v383, %v383
    %v391 = vperm.slane %v389, 0
    %v392 = vunpack.c.l.bf16 %v371
    %v393 = vunpack.c.h.bf16 %v371
    %v394 = vunpack.c.l.bf16 %v387
    %v395 = vunpack.c.l.bf16 %v391
    %v396 = vadd.f32 %v392, %v394
    %v397 = vadd.f32 %v393, %v395
    %v398 = vpack.c.bf16 %v397, %v396
    %v399 = vunpack.c.l.bf16 %v398
    %v400 = vunpack.c.h.bf16 %v398
    %v401 = vmax.f32 %v399, 0.0
    %v402 = vmax.f32 %v400, 0.0
    %v403 = vpack.c.bf16 %v401, %v401
    %v404 = vpack.c.bf16 %v402, %v402
    %v405 = vld [vmem:[%s5] sm:$0xf]
    %v406 = vld [vmem:[%s5 + $0x4] sm:$0xf]
    %v407 = vld [vmem:[%s5 + $0x8] sm:$0xf]
    %v408 = vld [vmem:[%s5 + $0xc] sm:$0xf]
    %v409 = vld [vmem:[%s5 + $0x10] sm:$0xf]
    %v410 = vld [vmem:[%s5 + $0x14] sm:$0xf]
    %v411 = vld [vmem:[%s5 + $0x18] sm:$0xf]
    %v412 = vld [vmem:[%s5 + $0x1c] sm:$0xf]
    %v413 = vld [vmem:[%s5 + $0x20] sm:$0xf]
    %v414 = vld [vmem:[%s5 + $0x24] sm:$0xf]
    %v415 = vld [vmem:[%s5 + $0x28] sm:$0xf]
    %v416 = vld [vmem:[%s5 + $0x2c] sm:$0xf]
    %v417 = vld [vmem:[%s5 + $0x30] sm:$0xf]
    %v418 = vld [vmem:[%s5 + $0x34] sm:$0xf]
    %v419 = vld [vmem:[%s5 + $0x38] sm:$0xf]
    %v420 = vld [vmem:[%s5 + $0x3c] sm:$0xf]
    %v421 = vld [vmem:[%s5 + $0x40] sm:$0xf]
    %v422 = vld [vmem:[%s5 + $0x44] sm:$0xf]
    %v423 = vld [vmem:[%s5 + $0x48] sm:$0xf]
    %v424 = vld [vmem:[%s5 + $0x4c] sm:$0xf]
    %v425 = vld [vmem:[%s5 + $0x50] sm:$0xf]
    %v426 = vld [vmem:[%s5 + $0x54] sm:$0xf]
    %v427 = vld [vmem:[%s5 + $0x58] sm:$0xf]
    %v428 = vld [vmem:[%s5 + $0x5c] sm:$0xf]
    %v429 = vld [vmem:[%s5 + $0x60] sm:$0xf]
    %v430 = vld [vmem:[%s5 + $0x64] sm:$0xf]
    %v431 = vld [vmem:[%s5 + $0x68] sm:$0xf]
    %v432 = vld [vmem:[%s5 + $0x6c] sm:$0xf]
    %v433 = vld [vmem:[%s5 + $0x70] sm:$0xf]
    %v434 = vld [vmem:[%s5 + $0x74] sm:$0xf]
    %v435 = vld [vmem:[%s5 + $0x78] sm:$0xf]
    %v436 = vld [vmem:[%s5 + $0x7c] sm:$0xf]
    %v437 = vld [vmem:[%s6] sm:$0x1]
    %v439 = vperm.slane %v437, 0
    %v473 = vunpack.c.l.b16 %v405
    %v474 = vunpack.c.l.b16 %v406
    %v475 = vunpack.c.l.b16 %v407
    %v476 = vunpack.c.l.b16 %v408
    %v477 = vunpack.c.l.b16 %v409
    %v478 = vunpack.c.l.b16 %v410
    %v479 = vunpack.c.l.b16 %v411
    %v480 = vunpack.c.l.b16 %v412
    %v481 = vunpack.c.l.b16 %v413
    %v482 = vunpack.c.l.b16 %v414
    %v483 = vunpack.c.l.b16 %v415
    %v484 = vunpack.c.l.b16 %v416
    %v485 = vunpack.c.l.b16 %v417
    %v486 = vunpack.c.l.b16 %v418
    %v487 = vunpack.c.l.b16 %v419
    %v488 = vunpack.c.l.b16 %v420
    %v489 = vunpack.c.l.b16 %v421
    %v490 = vunpack.c.l.b16 %v422
    %v491 = vunpack.c.l.b16 %v423
    %v492 = vunpack.c.l.b16 %v424
    %v493 = vunpack.c.l.b16 %v425
    %v494 = vunpack.c.l.b16 %v426
    %v495 = vunpack.c.l.b16 %v427
    %v496 = vunpack.c.l.b16 %v428
    %v497 = vunpack.c.l.b16 %v429
    %v498 = vunpack.c.l.b16 %v430
    %v499 = vunpack.c.l.b16 %v431
    %v500 = vunpack.c.l.b16 %v432
    %v501 = vunpack.c.l.b16 %v433
    %v502 = vunpack.c.l.b16 %v434
    %v503 = vunpack.c.l.b16 %v435
    %v504 = vunpack.c.l.b16 %v436
    %v505 = vpack.c.b16 %v474, %v473
    %v506 = vpack.c.b16 %v476, %v475
    %v507 = vpack.c.b16 %v478, %v477
    %v508 = vpack.c.b16 %v480, %v479
    %v509 = vpack.c.b16 %v482, %v481
    %v510 = vpack.c.b16 %v484, %v483
    %v511 = vpack.c.b16 %v486, %v485
    %v512 = vpack.c.b16 %v488, %v487
    %v513 = vpack.c.b16 %v490, %v489
    %v514 = vpack.c.b16 %v492, %v491
    %v515 = vpack.c.b16 %v494, %v493
    %v516 = vpack.c.b16 %v496, %v495
    %v517 = vpack.c.b16 %v498, %v497
    %v518 = vpack.c.b16 %v500, %v499
    %v519 = vpack.c.b16 %v502, %v501
    %v520 = vpack.c.b16 %v504, %v503
    %537 = vmatpush.bf16.msra.mxu0 %v512
    %538 = vmatpush.bf16.msra.mxu0 %v511
    %539 = vmatpush.bf16.msra.mxu0 %v510
    %540 = vmatpush.bf16.msra.mxu0 %v509
    %541 = vmatpush.bf16.msra.mxu0 %v508
    %542 = vmatpush.bf16.msra.mxu0 %v507
    %543 = vmatpush.bf16.msra.mxu0 %v506
    %544 = vmatpush.bf16.msra.mxu0 %v505
    %545 = vmatmul.bf16.gmra.mxu0 %v403
    %v546 = vpop.f32.mrf.mxu0
    %v547 = vadd.f32 %v439, %v546
    %v548 = vpop.f32.mrf.mxu0
    %549 = vdwg.mxu0
    %550 = vmatpush.bf16.msra.mxu0 %v520
    %551 = vmatpush.bf16.msra.mxu0 %v519
    %552 = vmatpush.bf16.msra.mxu0 %v518
    %553 = vmatpush.bf16.msra.mxu0 %v517
    %554 = vmatpush.bf16.msra.mxu0 %v516
    %555 = vmatpush.bf16.msra.mxu0 %v515
    %556 = vmatpush.bf16.msra.mxu0 %v514
    %557 = vmatpush.bf16.msra.mxu0 %v513
    %558 = vmatmul.bf16.gmra.mxu0 %v404
    %v559 = vpop.f32.mrf.mxu0
    %v560 = vadd.f32 %v547, %v559
    %v561 = vpop.f32.mrf.mxu0
    %562 = vdwg.mxu0
    %v563 = vtanh.pop %v560
    %v564 = vld [vmem:[%s7] sm:$0x1]
    %v566 = vperm.slane %v564, 0
    %v568 = vmul.f32 %v563, %v566
    %v569 = vld [vmem:[%s8] sm:$0x1]
    %v571 = vperm.slane %v569, 0
    %v573 = vadd.f32 %v568, %v571
    %vm574 = vcmask 31744
    %575 = vst.msk [vmem:[%s9] sm:$0xff] %vm574, %v573
    // Predicated region
    $region42: #{tpu_custom_call.1} parent=1 // pred_check
      _
    $region43: #{tpu_custom_call.1} parent=1 // pred_check_branch
      %577 = sbr.rel (0) target = $region45
    $region44: #{tpu_custom_call.1} parent=1 // pred_region
      _
    $region45: #{tpu_custom_call.1} parent=1 // pred_fallthru
      _
    // Predicated region
    $region46: #{tpu_custom_call.1} parent=1 // pred_check
      _
    $region47: #{tpu_custom_call.1} parent=1 // pred_check_branch
      %579 = sbr.rel (0) target = $region49
    $region48: #{tpu_custom_call.1} parent=1 // pred_region
      _
    $region49: #{tpu_custom_call.1} parent=1 // pred_fallthru
      _
    %580 = vsyncpa [#allocation3], 1

</llo_original>
